<compile_context>
chip_gen: v6e
topology: v6e:2x2x1
jax: 0.10.0
libtpu: 0.0.40
codegen_flags: <defaults>
</compile_context>

<pallas_src>
import jax
import jax.numpy as jnp
from jax import lax
from jax.experimental import pallas as pl
from jax.experimental.pallas import tpu as pltpu


def _round_up(x, m):
    return ((x + m - 1) // m) * m


def _make_kernel(*, multi_k, k_rem, tk, compute_dtype, out_dtype):
    """Build the linear kernel.

    multi_k: True -> 3-D grid (M, V, K) with accumulation into o_ref.
             False -> 2-D grid (M, V), single dot + bias.
    k_rem:   if > 0, number of valid columns in the LAST K block; the OOB tail
             of both operands is zero-masked so garbage never reaches the MXU.
    """

    def kernel(x_ref, w_ref, b_ref, o_ref):
        x = x_ref[...]
        w = w_ref[...]

        if multi_k:
            k = pl.program_id(2)
            nk = pl.num_programs(2)
            if k_rem:
                col = lax.broadcasted_iota(jnp.int32, (1, tk), 1)
                keep = (col < k_rem) | (k < nk - 1)
                x = jnp.where(keep, x, 0.0)
                w = jnp.where(keep, w, 0.0)

        xc = x.astype(compute_dtype)
        wc = w.astype(compute_dtype)
        # Contract on D for both operands: (tm, tk) x (tn, tk) -> (tm, tn).
        partial = lax.dot_general(
            xc, wc,
            dimension_numbers=(((1,), (1,)), ((), ())),
            preferred_element_type=jnp.float32,
        )

        if multi_k:
            @pl.when(k == 0)
            def _first():
                o_ref[...] = partial.astype(out_dtype)

            @pl.when(k > 0)
            def _accum():
                o_ref[...] = (o_ref[...] + partial).astype(out_dtype)

            @pl.when(k == nk - 1)
            def _bias():
                o_ref[...] = (o_ref[...] + b_ref[...]).astype(out_dtype)
        else:
            o_ref[...] = (partial + b_ref[...]).astype(out_dtype)

    return kernel


def output_layer_forward(hidden, weight, bias, *, tm=512, tn=1024, tk=512,
                         compute_dtype=jnp.bfloat16,
                         vmem_limit_bytes=48 * 1024 * 1024):
    """Pallas TPU implementation of OutputLayer.forward.

    hidden: [B, N, D] float32
    weight: [V, D]    float32 (or bfloat16)   -- torch nn.Linear.weight layout
    bias:   [V]       float32
    returns logits [B, N, V] float32

    compute_dtype=jnp.bfloat16 (default) uses the fast bf16 MXU path with f32
    accumulation; pass jnp.float32 for an exact-match nn.Linear reference path.
    """
    B, N, D = hidden.shape
    V, Dw = weight.shape
    assert Dw == D, "weight must be [V, D]"
    M = B * N
    out_dtype = jnp.float32

    x2d = hidden.reshape(M, D)           # free reshape (merge leading dims)
    b2d = bias.reshape(1, V)

    # ---- tile selection (no HBM padding; boundary blocks are masked) ----
    tm = _round_up(min(tm, _round_up(M, 8)), 8)
    tn = _round_up(min(tn, _round_up(V, 128)), 128)
    if D <= tk:
        tk = D                            # block dim == full array dim is legal
    else:
        tk = max(128, (tk // 128) * 128)  # lane-aligned K tile

    # v7x has 2 TensorCores: make sure >= 2 blocks exist along a parallel axis
    # so the second core gets work even for decode-sized M.
    if pl.cdiv(M, tm) == 1 and pl.cdiv(V, tn) == 1 and V > 128:
        tn = _round_up(pl.cdiv(V, 2), 128)

    gm, gn, gk = pl.cdiv(M, tm), pl.cdiv(V, tn), pl.cdiv(D, tk)
    multi_k = gk > 1
    k_rem = (D % tk) if (multi_k and D % tk != 0) else 0

    kernel = _make_kernel(multi_k=multi_k, k_rem=k_rem, tk=tk,
                          compute_dtype=compute_dtype, out_dtype=out_dtype)

    if multi_k:
        grid = (gm, gn, gk)
        in_specs = [
            pl.BlockSpec((tm, tk), lambda i, j, k: (i, k)),   # x rows / K
            pl.BlockSpec((tn, tk), lambda i, j, k: (j, k)),   # W rows (=V) / K
            pl.BlockSpec((1, tn), lambda i, j, k: (0, j)),    # bias cols
        ]
        out_specs = pl.BlockSpec((tm, tn), lambda i, j, k: (i, j))
        dims = ("parallel", "parallel", "arbitrary")
    else:
        grid = (gm, gn)
        in_specs = [
            pl.BlockSpec((tm, tk), lambda i, j: (i, 0)),
            pl.BlockSpec((tn, tk), lambda i, j: (j, 0)),
            pl.BlockSpec((1, tn), lambda i, j: (0, j)),
        ]
        out_specs = pl.BlockSpec((tm, tn), lambda i, j: (i, j))
        dims = ("parallel", "parallel")

    # Streamed HBM traffic: x is re-read once per V tile, W once per M tile.
    bytes_accessed = (x2d.dtype.itemsize * gn * M * D
                      + weight.dtype.itemsize * gm * V * D
                      + 4 * M * V)
    cost = pl.CostEstimate(flops=2 * M * D * V, transcendentals=0,
                           bytes_accessed=int(bytes_accessed))

    out2d = pl.pallas_call(
        kernel,
        out_shape=jax.ShapeDtypeStruct((M, V), out_dtype),
        grid_spec=pltpu.PrefetchScalarGridSpec(
            num_scalar_prefetch=0,
            grid=grid,
            in_specs=in_specs,
            out_specs=out_specs,
        ),
        compiler_params=pltpu.CompilerParams(
            dimension_semantics=dims,
            vmem_limit_bytes=vmem_limit_bytes,
        ),
        cost_estimate=cost,
    )(x2d, weight, b2d)

    return out2d.reshape(B, N, V)


def _reference(hidden, weight, bias):
    B, N, D = hidden.shape
    V = weight.shape[0]
    out = lax.dot_general(
        hidden.reshape(B * N, D), weight,
        dimension_numbers=(((1,), (1,)), ((), ())),
        precision=lax.Precision.HIGHEST,
        preferred_element_type=jnp.float32,
    ) + bias
    return out.reshape(B, N, V)


def _make_inputs(key, B, N, D, V):
    k_h, k_w, k_b = jax.random.split(key, 3)
    bound = 1.0 / (D ** 0.5)
    hidden = jax.random.normal(k_h, (B, N, D), dtype=jnp.float32)
    weight = jax.random.uniform(k_w, (V, D), minval=-bound, maxval=bound,
                                dtype=jnp.float32)
    bias = jax.random.uniform(k_b, (V,), minval=-bound, maxval=bound,
                              dtype=jnp.float32)
    return hidden, weight, bias


if __name__ == "__main__":
    key = jax.random.PRNGKey(0)
    k1, k2, k3 = jax.random.split(key, 3)

    # --- Config 1: module-like small config (hidden_dim=32, vocab=256) ------
    h, w, b = _make_inputs(k1, 2, 8, 32, 256)
    ref = _reference(h, w, b)
    out_f32 = jax.block_until_ready(
        output_layer_forward(h, w, b, compute_dtype=jnp.float32))
    assert out_f32.shape == (2, 8, 256)
    assert jnp.allclose(out_f32, ref, atol=1e-4, rtol=1e-4)
    out_bf16 = jax.block_until_ready(output_layer_forward(h, w, b))
    assert jnp.allclose(out_bf16, ref, atol=5e-2, rtol=5e-2)

    # --- Config 2: non-divisible M/V -> boundary (masked) blocks, no pads ---
    h, w, b = _make_inputs(k2, 2, 12, 96, 1000)
    ref = _reference(h, w, b)
    out_f32 = jax.block_until_ready(
        output_layer_forward(h, w, b, compute_dtype=jnp.float32))
    assert out_f32.shape == (2, 12, 1000)
    assert jnp.allclose(out_f32, ref, atol=1e-4, rtol=1e-4)
    out_bf16 = jax.block_until_ready(output_layer_forward(h, w, b))
    assert jnp.allclose(out_bf16, ref, atol=5e-2, rtol=5e-2)

    # --- Config 3: D > tk -> 3-D grid, output-resident K accumulation and
    #     in-kernel zero-masking of the K tail (640 = 2*256 + 128) ------------
    h, w, b = _make_inputs(k3, 1, 8, 640, 384)
    ref = _reference(h, w, b)
    out_f32 = jax.block_until_ready(
        output_layer_forward(h, w, b, tk=256, compute_dtype=jnp.float32))
    assert out_f32.shape == (1, 8, 384)
    assert jnp.allclose(out_f32, ref, atol=1e-3, rtol=1e-4)

    print("KERNEL_OK")
</pallas_src>

<mosaic_0001>
module attributes {stable_mosaic.version = 11 : i64} {
  func.func @kernel(%arg0: i32, %arg1: i32, %arg2: memref<16x32xf32, #tpu.memory_space<vmem>>, %arg3: memref<128x32xf32, #tpu.memory_space<vmem>>, %arg4: memref<1x128xf32, #tpu.memory_space<vmem>>, %arg5: memref<16x128xf32, #tpu.memory_space<vmem>>) attributes {dimension_semantics = [#tpu.dimension_semantics<parallel>, #tpu.dimension_semantics<parallel>], iteration_bounds = array<i64: 1, 2>, scalar_prefetch = 0 : i64, scratch_operands = 0 : i64, tpu.core_type = #tpu.core_type<tc>, window_params = [{transform_indices = @transform_0, window_bounds = array<i64: 16, 32>}, {transform_indices = @transform_1, window_bounds = array<i64: 128, 32>}, {transform_indices = @transform_2, window_bounds = array<i64: 1, 128>}, {transform_indices = @transform_3, window_bounds = array<i64: 16, 128>}]} {
    %c0 = arith.constant 0 : index
    %c0_0 = arith.constant 0 : index
    %0 = vector.load %arg2[%c0, %c0_0] : memref<16x32xf32, #tpu.memory_space<vmem>>, vector<16x32xf32>
    %c0_1 = arith.constant 0 : index
    %c0_2 = arith.constant 0 : index
    %1 = vector.load %arg3[%c0_1, %c0_2] : memref<128x32xf32, #tpu.memory_space<vmem>>, vector<128x32xf32>
    %cst = arith.constant dense<0.000000e+00> : vector<16x128xf32>
    %2 = tpu.matmul %0, %1, %cst {dimension_numbers = #tpu.dot_dimension_numbers<[1], [1], [0], [0], [0, 0, 1, 0], [], []>} : vector<16x32xf32>, vector<128x32xf32>, vector<16x128xf32> -> vector<16x128xf32>
    %c0_3 = arith.constant 0 : index
    %c0_4 = arith.constant 0 : index
    %3 = vector.load %arg4[%c0_3, %c0_4] : memref<1x128xf32, #tpu.memory_space<vmem>>, vector<1x128xf32>
    %4 = vector.broadcast %3 : vector<1x128xf32> to vector<16x128xf32>
    %5 = arith.addf %2, %4 : vector<16x128xf32>
    %c0_5 = arith.constant 0 : index
    %c0_6 = arith.constant 0 : index
    %6 = vector.load %arg5[%c0_5, %c0_6] : memref<16x128xf32, #tpu.memory_space<vmem>>, vector<16x128xf32>
    tpu.vector_store %arg5[%c0_5, %c0_6], %5 {strides = array<i32>} : memref<16x128xf32, #tpu.memory_space<vmem>>, vector<16x128xf32>,
    return
  }
  func.func @transform_0(%arg0: i32, %arg1: i32) -> (i32, i32) {
    %c0_i32 = arith.constant 0 : i32
    %c0_i32_0 = arith.constant 0 : i32
    return %arg0, %c0_i32 : i32, i32
  }
  func.func @transform_1(%arg0: i32, %arg1: i32) -> (i32, i32) {
    %c0_i32 = arith.constant 0 : i32
    %c0_i32_0 = arith.constant 0 : i32
    return %arg1, %c0_i32 : i32, i32
  }
  func.func @transform_2(%arg0: i32, %arg1: i32) -> (i32, i32) {
    %c0_i32 = arith.constant 0 : i32
    %c0_i32_0 = arith.constant 0 : i32
    return %c0_i32, %arg1 : i32, i32
  }
  func.func @transform_3(%arg0: i32, %arg1: i32) -> (i32, i32) {
    %c0_i32 = arith.constant 0 : i32
    return %arg0, %arg1 : i32, i32
  }
}

</mosaic_0001>

<llo_original>
// kernel: tpu_custom_call.1
$region0: #{tpu_custom_call.1}
  #allocation0 [shape = 'u32[]', space=smem, size = 0x4, offset = 0x4, fixed_abs, tag = 'smem constant byte address 0x4 - core index']
  #allocation1 [shape = 'u32[144,128]{1,0:T(1,128)}', space=vmem, size = 0x12000, scoped, tag = 'internal scratch']
  %s0 = inlined_call_operand.vmem [shape: f32[16,32], index: 0, kind: input, shape index: {}]
  %s1 = inlined_call_operand.vmem [shape: f32[256,32], index: 1, kind: input, shape index: {}]
  %s2 = inlined_call_operand.vmem [shape: f32[1,256], index: 2, kind: input, shape index: {}]
  %s3 = inlined_call_operand.hbm [shape: f32[16,256], index: 3, kind: output, shape index: {}]
  %s4 = sld [smem:[#allocation0]]
  $region45: #{tpu_custom_call.1} parent=0
    _
  %s6 = ssub.s32 1, %s4
  %s7 = scalar_select 0, %s6, %s4
  $region1: #{tpu_custom_call.1} parent=0
    #allocation2 [shape = 'u8[16384]{0}', space=vmem, size = 0x4000, scoped, tag = 'output window, operand 0']
    #allocation3 [shape = 's32[2]{0}', space=sflag, size = 0x8, scoped, tag = 'scoped memory for tpu_custom_call.1']
    %8 = vsyncpa [#allocation3], 0
    %s9 = scalar_lea.sflag [#allocation3], 1
    %10 = vsyncpa %s9, 0
    loop: start=0, step=1, limit=4
    $region2: #{tpu_custom_call.1} parent=1 // loop_pre_header
      _
    $region3: #{tpu_custom_call.1} parent=1 // loop_header
      %s12 = sphi 0, %s16
      %p13 = scmp.ge.s32.totalorder %s12, 4
      %s19 = sphi 0, %s31
      %s20 = sphi 0, %s27
      %s21 = sphi 0, %s19
      %s22 = sphi 0, %s20
      %s23 = sphi 0, %s21
      %s24 = sphi 0, %s22
      %s34 = sphi 0, %s36
      %s37 = sphi 0, %s34
      %s38 = sphi 0, %s37
      %s54 = sphi 0, %s38
      %s60 = sphi 0, %s62
      %s63 = sphi 0, %s60
      %s64 = sphi 0, %s63
      %s80 = sphi 0, %s64
      %s86 = sphi 0, %s88
      %s89 = sphi 0, %s86
      %s90 = sphi 0, %s89
      %s106 = sphi 0, %s90
      %s114 = sphi 0, %s116
      %s117 = sphi 0, %s114
      %s118 = sphi 0, %s117
      %s134 = sphi 0, %s118
    $region4: #{tpu_custom_call.1} parent=1 // loop_header_branch
      %15 = sbr.rel (%p13) target = $region8
    $region5: #{tpu_custom_call.1} parent=1 // loop_body
      %s17 = ssub.s32 %s12, 1
      %s18 = ssub.s32 %s12, 2
      %s25 = sadd.s32 1, %s20
      %p26 = scmp.ge.s32.totalorder %s25, 2
      %s27 = scalar_select %p26, 0, %s25
      %s28 = sadd.s32 1, %s19
      %s29 = scalar_select %p26, %s28, %s19
      %p30 = scmp.ge.s32.totalorder %s29, 1
      %s31 = scalar_select %p30, 0, %s29
      %s32 = ssub.s32 %s19, %s31
      %p33 = scmp.eq.s32.totalorder %s32, 0
      %s35 = sadd.s32 %s34, 1
      %s36 = scalar_select %p33, %s34, %s35
      %p39 = pneg %p33
      %p40 = scmp.eq.s32.totalorder %s12, 1
      %p41 = por %p39, %p40
      %p42 = scmp.ne.s32.totalorder %s34, %s37
      %p43 = scmp.eq.s32.totalorder %s12, 0
      %p44 = por %p42, %p43
      %p45 = scmp.ne.s32.totalorder %s34, %s37
      %p46 = scmp.eq.s32.totalorder %s17, 1
      %p47 = por %p45, %p46
      %p48 = scmp.ne.s32.totalorder %s37, %s38
      %p49 = scmp.eq.s32.totalorder %s17, 0
      %p50 = por %p48, %p49
      %p51 = scmp.ne.s32.totalorder %s37, %s38
      %p52 = scmp.eq.s32.totalorder %s18, 1
      %p53 = por %p51, %p52
      %p55 = scmp.ne.s32.totalorder %s38, %s54
      %p56 = scmp.eq.s32.totalorder %s18, 0
      %p57 = por %p55, %p56
      %s58 = ssub.s32 %s20, %s27
      %p59 = scmp.eq.s32.totalorder %s58, 0
      %s61 = sadd.s32 %s60, 1
      %s62 = scalar_select %p59, %s60, %s61
      %p65 = pneg %p59
      %p66 = scmp.eq.s32.totalorder %s12, 1
      %p67 = por %p65, %p66
      %p68 = scmp.ne.s32.totalorder %s60, %s63
      %p69 = scmp.eq.s32.totalorder %s12, 0
      %p70 = por %p68, %p69
      %p71 = scmp.ne.s32.totalorder %s60, %s63
      %p72 = scmp.eq.s32.totalorder %s17, 1
      %p73 = por %p71, %p72
      %p74 = scmp.ne.s32.totalorder %s63, %s64
      %p75 = scmp.eq.s32.totalorder %s17, 0
      %p76 = por %p74, %p75
      %p77 = scmp.ne.s32.totalorder %s63, %s64
      %p78 = scmp.eq.s32.totalorder %s18, 1
      %p79 = por %p77, %p78
      %p81 = scmp.ne.s32.totalorder %s64, %s80
      %p82 = scmp.eq.s32.totalorder %s18, 0
      %p83 = por %p81, %p82
      %s84 = ssub.s32 %s20, %s27
      %p85 = scmp.eq.s32.totalorder %s84, 0
      %s87 = sadd.s32 %s86, 1
      %s88 = scalar_select %p85, %s86, %s87
      %p91 = pneg %p85
      %p92 = scmp.eq.s32.totalorder %s12, 1
      %p93 = por %p91, %p92
      %p94 = scmp.ne.s32.totalorder %s86, %s89
      %p95 = scmp.eq.s32.totalorder %s12, 0
      %p96 = por %p94, %p95
      %p97 = scmp.ne.s32.totalorder %s86, %s89
      %p98 = scmp.eq.s32.totalorder %s17, 1
      %p99 = por %p97, %p98
      %p100 = scmp.ne.s32.totalorder %s89, %s90
      %p101 = scmp.eq.s32.totalorder %s17, 0
      %p102 = por %p100, %p101
      %p103 = scmp.ne.s32.totalorder %s89, %s90
      %p104 = scmp.eq.s32.totalorder %s18, 1
      %p105 = por %p103, %p104
      %p107 = scmp.ne.s32.totalorder %s90, %s106
      %p108 = scmp.eq.s32.totalorder %s18, 0
      %p109 = por %p107, %p108
      %s110 = ssub.s32 %s19, %s31
      %s111 = ssub.s32 %s20, %s27
      %s112 = sor.u32 %s110, %s111
      %p113 = scmp.eq.s32.totalorder %s112, 0
      %s115 = sadd.s32 %s114, 1
      %s116 = scalar_select %p113, %s114, %s115
      %p119 = pneg %p113
      %p120 = scmp.eq.s32.totalorder %s12, 1
      %p121 = por %p119, %p120
      %p122 = scmp.ne.s32.totalorder %s114, %s117
      %p123 = scmp.eq.s32.totalorder %s12, 0
      %p124 = por %p122, %p123
      %p125 = scmp.ne.s32.totalorder %s114, %s117
      %p126 = scmp.eq.s32.totalorder %s17, 1
      %p127 = por %p125, %p126
      %p128 = scmp.ne.s32.totalorder %s117, %s118
      %p129 = scmp.eq.s32.totalorder %s17, 0
      %p130 = por %p128, %p129
      %p131 = scmp.ne.s32.totalorder %s117, %s118
      %p132 = scmp.eq.s32.totalorder %s18, 1
      %p133 = por %p131, %p132
      %p135 = scmp.ne.s32.totalorder %s118, %s134
      %p136 = scmp.eq.s32.totalorder %s18, 0
      %p137 = por %p135, %p136
      %p138 = scmp.le.s32.totalorder 1, %s12
      %p139 = scmp.lt.s32.totalorder %s12, 3
      %p140 = pnand %p138, %p139
      %p141 = pneg %p140
      // Predicated region
      $region9: #{tpu_custom_call.1} parent=5 // pred_check
        _
      $region10: #{tpu_custom_call.1} parent=5 // pred_check_branch
        %143 = sbr.rel (%p140) target = $region12
      $region11: #{tpu_custom_call.1} parent=5 // pred_region
        %s144 = ssub.s32 %s12, 1
        // Predicated region
        $region13: #{tpu_custom_call.1} parent=11 // pred_check
          %p145 = pneg %p50
        $region14: #{tpu_custom_call.1} parent=11 // pred_check_branch
          %147 = sbr.rel (%p145) target = $region16
        $region15: #{tpu_custom_call.1} parent=11 // pred_region
          %s148 = smul.u32 2, %s21
          %p149 = scmp.lt.s32.totalorder %s148, 1
          %s150 = scalar_select %p149, %s148, 1
          %s151 = smul.addr %s150, 8
          %s152 = scalar_lea.vmem %s0, %s151
          %s153 = smul.u32 2, %s21
        $region16: #{tpu_custom_call.1} parent=11 // pred_fallthru
          _
      $region12: #{tpu_custom_call.1} parent=5 // pred_fallthru
        _
      %p154 = scmp.lt.s32.totalorder %s12, 2
      // Predicated region
      $region17: #{tpu_custom_call.1} parent=5 // pred_check
        %p155 = pneg %p154
      $region18: #{tpu_custom_call.1} parent=5 // pred_check_branch
        %157 = sbr.rel (%p155) target = $region20
      $region19: #{tpu_custom_call.1} parent=5 // pred_region
        // Predicated region
        $region21: #{tpu_custom_call.1} parent=19 // pred_check
          %p158 = pneg %p70
        $region22: #{tpu_custom_call.1} parent=19 // pred_check_branch
          %160 = sbr.rel (%p158) target = $region24
        $region23: #{tpu_custom_call.1} parent=19 // pred_region
          %s161 = smul.u32 16, %s20
          %p162 = scmp.lt.s32.totalorder %s161, 31
          %s163 = scalar_select %p162, %s161, 31
          %s164 = smul.addr %s163, 8
          %s165 = scalar_lea.vmem %s1, %s164
          %s166 = smul.u32 16, %s20
        $region24: #{tpu_custom_call.1} parent=19 // pred_fallthru
          _
        // Predicated region
        $region25: #{tpu_custom_call.1} parent=19 // pred_check
          %p167 = pneg %p96
        $region26: #{tpu_custom_call.1} parent=19 // pred_check_branch
          %169 = sbr.rel (%p167) target = $region28
        $region27: #{tpu_custom_call.1} parent=19 // pred_region
          %p170 = scmp.lt.s32.totalorder %s20, 1
          %s171 = scalar_select %p170, %s20, 1
          %s172 = scalar_lea.vmem %s2, %s171
        $region28: #{tpu_custom_call.1} parent=19 // pred_fallthru
          _
      $region20: #{tpu_custom_call.1} parent=5 // pred_fallthru
        _
      %p173 = scmp.le.s32.totalorder 1, %s12
      %p174 = scmp.lt.s32.totalorder %s12, 3
      %p175 = pnand %p173, %p174
      %p176 = pneg %p175
      // Predicated region
      $region29: #{tpu_custom_call.1} parent=5 // pred_check
        _
      $region30: #{tpu_custom_call.1} parent=5 // pred_check_branch
        %178 = sbr.rel (%p175) target = $region32
      $region31: #{tpu_custom_call.1} parent=5 // pred_region
        %s179 = ssub.s32 %s12, 1
        %s180 = smul.u32 2, %s21
        %p181 = scmp.lt.s32.totalorder %s180, 1
        %s182 = scalar_select %p181, %s180, 1
        %s183 = smul.addr %s182, 8
        %s184 = scalar_lea.vmem %s0, %s183
        %p185 = pneg %p50
        %p186 = pneg %p47
        %s187 = smul.u32 16, %s22
        %p188 = scmp.lt.s32.totalorder %s187, 31
        %s189 = scalar_select %p188, %s187, 31
        %s190 = smul.addr %s189, 8
        %s191 = scalar_lea.vmem %s1, %s190
        %p192 = pneg %p76
        %p193 = pneg %p73
        %p194 = scmp.lt.s32.totalorder %s22, 1
        %s195 = scalar_select %p194, %s22, 1
        %s196 = scalar_lea.vmem %s2, %s195
        %p197 = pneg %p102
        %p198 = pneg %p99
        %p199 = pneg %p130
        %p200 = pneg %p127
        %s201 = sand.u32 %s117, 1
        %s202 = scalar_lea.sflag [#allocation3], %s201
        %s203 = sand.u32 %s117, 1
        %s204 = smul.addr %s203, 16
        %s205 = scalar_lea.vmem [#allocation2], %s204
        %s206 = smul.u32 2, %s21
        %p207 = scmp.lt.s32.totalorder %s206, 1
        %s208 = scalar_select %p207, %s206, 1
        %s209 = smul.addr %s208, 8
        %s210 = scalar_lea.vmem %s0, %s209
        %s211 = smul.u32 2, %s21
        %s212 = smul.u32 16, %s22
        %p213 = scmp.lt.s32.totalorder %s212, 31
        %s214 = scalar_select %p213, %s212, 31
        %s215 = smul.addr %s214, 8
        %s216 = scalar_lea.vmem %s1, %s215
        %s217 = smul.u32 16, %s22
        %p218 = scmp.lt.s32.totalorder %s22, 1
        %s219 = scalar_select %p218, %s22, 1
        %s220 = scalar_lea.vmem %s2, %s219
        %s221 = smul.u32 2, %s21
        %v222 = vld [vmem:[%s210] sm:$0xff]
        %v223 = vld [vmem:[%s210 + $0x8] sm:$0xff]
        %v224 = vld [vmem:[%s216] sm:$0xff]
        %v225 = vld [vmem:[%s216 + $0x8] sm:$0xff]
        %v226 = vld [vmem:[%s216 + $0x10] sm:$0xff]
        %v227 = vld [vmem:[%s216 + $0x18] sm:$0xff]
        %v228 = vld [vmem:[%s216 + $0x20] sm:$0xff]
        %v229 = vld [vmem:[%s216 + $0x28] sm:$0xff]
        %v230 = vld [vmem:[%s216 + $0x30] sm:$0xff]
        %v231 = vld [vmem:[%s216 + $0x38] sm:$0xff]
        %v232 = vld [vmem:[%s216 + $0x40] sm:$0xff]
        %v233 = vld [vmem:[%s216 + $0x48] sm:$0xff]
        %v234 = vld [vmem:[%s216 + $0x50] sm:$0xff]
        %v235 = vld [vmem:[%s216 + $0x58] sm:$0xff]
        %v236 = vld [vmem:[%s216 + $0x60] sm:$0xff]
        %v237 = vld [vmem:[%s216 + $0x68] sm:$0xff]
        %v238 = vld [vmem:[%s216 + $0x70] sm:$0xff]
        %v239 = vld [vmem:[%s216 + $0x78] sm:$0xff]
        %v240 = vld [vmem:[%s220] sm:$0x1]
        %v242 = vlaneseq
        %v243 = vshrl.u32 %v242, 7
        %v244 = vsub.s32 0, %v243
        %v245 = vrot.slane %v240, %v244
        %vm247 = vcmask 261120
        %v249 = vsel %vm247, %v222, 0
        %v252 = vsel %vm247, %v223, 0
        %v255 = vsel %vm247, %v224, 0
        %v258 = vsel %vm247, %v225, 0
        %v261 = vsel %vm247, %v226, 0
        %v264 = vsel %vm247, %v227, 0
        %v267 = vsel %vm247, %v228, 0
        %v270 = vsel %vm247, %v229, 0
        %v273 = vsel %vm247, %v230, 0
        %v276 = vsel %vm247, %v231, 0
        %v279 = vsel %vm247, %v232, 0
        %v282 = vsel %vm247, %v233, 0
        %v285 = vsel %vm247, %v234, 0
        %v288 = vsel %vm247, %v235, 0
        %v291 = vsel %vm247, %v236, 0
        %v294 = vsel %vm247, %v237, 0
        %v297 = vsel %vm247, %v238, 0
        %v300 = vsel %vm247, %v239, 0
        %302 = vmatprep.subr.mxu0 0.0
        %303 = vmatpush1.xpose.msra.mxu0 %v300
        %304 = vmatprep.subr.mxu0 0.0
        %305 = vmatpush1.xpose.msra.mxu0 %v297
        %306 = vmatprep.subr.mxu0 0.0
        %307 = vmatpush1.xpose.msra.mxu0 %v294
        %308 = vmatprep.subr.mxu0 0.0
        %309 = vmatpush1.xpose.msra.mxu0 %v291
        %310 = vmatprep.subr.mxu0 0.0
        %311 = vmatpush1.xpose.msra.mxu0 %v288
        %312 = vmatprep.subr.mxu0 0.0
        %313 = vmatpush1.xpose.msra.mxu0 %v285
        %314 = vmatprep.subr.mxu0 0.0
        %315 = vmatpush1.xpose.msra.mxu0 %v282
        %316 = vmatprep.subr.mxu0 0.0
        %317 = vmatpush1.xpose.msra.mxu0 %v279
        %318 = vmatprep.subr.mxu0 0.0
        %319 = vmatpush1.xpose.msra.mxu0 %v276
        %320 = vmatprep.subr.mxu0 0.0
        %321 = vmatpush1.xpose.msra.mxu0 %v273
        %322 = vmatprep.subr.mxu0 0.0
        %323 = vmatpush1.xpose.msra.mxu0 %v270
        %324 = vmatprep.subr.mxu0 0.0
        %325 = vmatpush1.xpose.msra.mxu0 %v267
        %326 = vmatprep.subr.mxu0 0.0
        %327 = vmatpush1.xpose.msra.mxu0 %v264
        %328 = vmatprep.subr.mxu0 0.0
        %329 = vmatpush1.xpose.msra.mxu0 %v261
        %330 = vmatprep.subr.mxu0 0.0
        %331 = vmatpush1.xpose.msra.mxu0 %v258
        %332 = vmatprep.subr.mxu0 0.0
        %333 = vmatpush1.xpose.msra.mxu0 %v255
        %334 = vmatprep.subr.mxu0 0.0
        %335 = vmatpush2.xpose.msra.mxu0 0.0
        %336 = vmatprep.subr.mxu0 0.0
        %337 = vmatpush2.xpose.msra.mxu0 0.0
        %338 = vmatprep.subr.mxu0 0.0
        %339 = vmatpush2.xpose.msra.mxu0 0.0
        %340 = vmatprep.subr.mxu0 0.0
        %341 = vmatpush2.xpose.msra.mxu0 0.0
        %342 = vmatprep.subr.mxu0 0.0
        %343 = vmatpush2.xpose.msra.mxu0 0.0
        %344 = vmatprep.subr.mxu0 0.0
        %345 = vmatpush2.xpose.msra.mxu0 0.0
        %346 = vmatprep.subr.mxu0 0.0
        %347 = vmatpush2.xpose.msra.mxu0 0.0
        %348 = vmatprep.subr.mxu0 0.0
        %349 = vmatpush2.xpose.msra.mxu0 0.0
        %350 = vmatprep.subr.mxu0 0.0
        %351 = vmatpush2.xpose.msra.mxu0 0.0
        %352 = vmatprep.subr.mxu0 0.0
        %353 = vmatpush2.xpose.msra.mxu0 0.0
        %354 = vmatprep.subr.mxu0 0.0
        %355 = vmatpush2.xpose.msra.mxu0 0.0
        %356 = vmatprep.subr.mxu0 0.0
        %357 = vmatpush2.xpose.msra.mxu0 0.0
        %358 = vmatprep.subr.mxu0 0.0
        %359 = vmatpush2.xpose.msra.mxu0 0.0
        %360 = vmatprep.subr.mxu0 0.0
        %361 = vmatpush2.xpose.msra.mxu0 0.0
        %362 = vmatprep.subr.mxu0 0.0
        %363 = vmatpush2.xpose.msra.mxu0 0.0
        %364 = vmatprep.subr.mxu0 0.0
        %365 = vmatpush2.xpose.msra.mxu0 0.0
        %366 = vmatprep.mubr.f32.mxu0 0.0
        %367 = vmatmul.mubr.f32.gmra.mxu0 %v249
        %v368 = vpop.f32.mrf.mxu0
        %v369 = vadd.f32 %v245, %v368
        %v370 = vpop.f32.mrf.mxu0
        %371 = vmatprep.mubr.f32.mxu0 0.0
        %372 = vmatmul.mubr.f32.gmra.mxu0 %v252
        %v373 = vpop.f32.mrf.mxu0
        %v374 = vadd.f32 %v245, %v373
        %v375 = vpop.f32.mrf.mxu0
        %376 = vdwg.mxu0
        %377 = vst [vmem:[%s205] sm:$0xff] %v369
        %378 = vst [vmem:[%s205 + $0x8] sm:$0xff] %v374
        %s379 = sand.u32 %s117, 1
        %s380 = scalar_lea.sflag [#allocation3], %s379
        %s381 = sand.u32 %s117, 1
        %s382 = smul.addr %s381, 16
        %s383 = scalar_lea.vmem [#allocation2], %s382
        // Predicated region
        $region33: #{tpu_custom_call.1} parent=31 // pred_check
          %p384 = pneg %p127
        $region34: #{tpu_custom_call.1} parent=31 // pred_check_branch
          %386 = sbr.rel (%p384) target = $region36
        $region35: #{tpu_custom_call.1} parent=31 // pred_region
          %s387 = smul.u32 2, %s21
          %s389 = ssub.s32 256, 256
          %390 = vsyncadd %s380, %s389
          %s391 = smul.addr %s387, 2
          %s392 = sadd.s32 %s22, %s391
          %s393 = smul.addr %s392, 128
          %s394 = scalar_lea.hbm %s3, %s393
          %s395 = sshll.u32 %s383, 4
          %s396 = int_to_ptr.vmem [resolvable:$true] %s395
          %401 = dma.vmem_to_hbm [thread:$0]  %s396, 256, %s394, %s380, 128, 256, 8
        $region36: #{tpu_custom_call.1} parent=31 // pred_fallthru
          _
      $region32: #{tpu_custom_call.1} parent=5 // pred_fallthru
        _
      %p402 = scmp.le.s32.totalorder 2, %s12
      // Predicated region
      $region37: #{tpu_custom_call.1} parent=5 // pred_check
        %p403 = pneg %p402
      $region38: #{tpu_custom_call.1} parent=5 // pred_check_branch
        %405 = sbr.rel (%p403) target = $region40
      $region39: #{tpu_custom_call.1} parent=5 // pred_region
        %s406 = ssub.s32 %s12, 2
        // Predicated region
        $region41: #{tpu_custom_call.1} parent=39 // pred_check
          %p407 = pneg %p133
        $region42: #{tpu_custom_call.1} parent=39 // pred_check_branch
          %409 = sbr.rel (%p407) target = $region44
        $region43: #{tpu_custom_call.1} parent=39 // pred_region
          %s410 = sand.u32 %s118, 1
          %s411 = scalar_lea.sflag [#allocation3], %s410
          %s412 = sand.u32 %s118, 1
          %s413 = smul.addr %s412, 16
          %s414 = scalar_lea.vmem [#allocation2], %s413
          %415 = dma.done %s411, 256
        $region44: #{tpu_custom_call.1} parent=39 // pred_fallthru
          _
      $region40: #{tpu_custom_call.1} parent=5 // pred_fallthru
        _
    $region6: #{tpu_custom_call.1} parent=1 // loop_footer
      %s16 = sadd.s32 1, %s12
    $region7: #{tpu_custom_call.1} parent=1 // loop_footer_branch
      %11 = sbr.rel target = $region3
    $region8: #{tpu_custom_call.1} parent=1 // loop_exit
      _
    %416 = vsyncpa [#allocation3], 1
    %s417 = scalar_lea.sflag [#allocation3], 1
    %418 = vsyncpa %s417, 1

</llo_original>
